<compile_context>
chip_gen: v6e
topology: v6e:2x2x1
jax: 0.10.0
libtpu: 0.0.40
codegen_flags: <defaults>
</compile_context>

<pallas_src>
import functools

import jax
import jax.numpy as jnp
from jax.experimental import pallas as pl
from jax.experimental.pallas import tpu as pltpu


def _round_up(n, m):
    return ((n + m - 1) // m) * m


def _three_layer_nn_kernel(x_ref, w1_ref, b1_ref, w2_ref, b2_ref, w3_ref, b3_ref,
                           o_ref, *, residual, activation, mxu_dtype):
    # Activation on the VPU (relu) / EUP (tanh), f32.
    if activation == "relu":
        act = lambda v: jnp.maximum(v, 0.0)
    elif activation == "tanh":
        act = jnp.tanh
    else:
        raise ValueError(f"unsupported activation: {activation}")

    def mm(v, w_ref):
        # v: (TILE_B, K) activations, w_ref: (K, N) pre-transposed weights.
        # Native (M,K)x(K,N) MXU feed, f32 accumulation.
        if mxu_dtype is not None:
            v = v.astype(mxu_dtype)
        return jnp.dot(v, w_ref[...], preferred_element_type=jnp.float32)

    x = x_ref[...].astype(jnp.float32)                  # (TILE_B, D_in_p)
    h = act(mm(x, w1_ref) + b1_ref[...])                # (TILE_B, H0_p)
    h = act(mm(h, w2_ref) + b2_ref[...])                # (TILE_B, H1_p)
    res = mm(h, w3_ref) + b3_ref[...]                   # (TILE_B, D_out_p)
    if residual:
        res = res + x                                   # f32 VPU epilogue
    o_ref[...] = res.astype(o_ref.dtype)


def three_layer_nn_forward(x, params, *, residual=True, activation="relu",
                           tile_b=None, mxu_dtype=None, core_parallel=False):
    """Fused Pallas forward for Three_Layer_NN.

    x:      (batch, input_dim)
    params: PyTorch-layout weights/biases:
            w1 (H0, D_in), b1 (H0,), w2 (H1, H0), b2 (H1,),
            w3 (D_out, H1), b3 (D_out,)
    """
    batch, d_in = x.shape
    w1, b1 = params["w1"], params["b1"]
    w2, b2 = params["w2"], params["b2"]
    w3, b3 = params["w3"], params["b3"]
    h0 = w1.shape[0]
    h1 = w2.shape[0]
    d_out = w3.shape[0]
    if residual:
        assert d_out == d_in, "residual path requires output_dim == input_dim"

    # ---- lane/sublane-aligned padded sizes ---------------------------------
    LANE = 128
    sub = 16 if mxu_dtype == jnp.bfloat16 else 8
    d_in_p = _round_up(d_in, LANE)
    h0_p = _round_up(h0, LANE)
    h1_p = _round_up(h1, LANE)
    d_out_p = _round_up(d_out, LANE)

    if tile_b is None:
        tile_b = min(256, _round_up(batch, sub))
    tile_b = _round_up(tile_b, sub)
    batch_p = _round_up(batch, tile_b)

    # ---- one-time wrapper-side padding / transpose / cast (cheap XLA ops) --
    w_dtype = mxu_dtype if mxu_dtype is not None else jnp.float32

    def prep_w(w, k_p, n_p):
        # PyTorch layout (out, in) -> padded (in_p, out_p), optional bf16 cast.
        wt = jnp.asarray(w, jnp.float32).T
        wt = jnp.pad(wt, ((0, k_p - wt.shape[0]), (0, n_p - wt.shape[1])))
        return wt.astype(w_dtype)

    def prep_b(b, n_p):
        b = jnp.asarray(b, jnp.float32).reshape(1, -1)
        return jnp.pad(b, ((0, 0), (0, n_p - b.shape[1])))

    w1t = prep_w(w1, d_in_p, h0_p)
    w2t = prep_w(w2, h0_p, h1_p)
    w3t = prep_w(w3, h1_p, d_out_p)
    b1r = prep_b(b1, h0_p)
    b2r = prep_b(b2, h1_p)
    b3r = prep_b(b3, d_out_p)
    x_p = jnp.pad(x, ((0, batch_p - batch), (0, d_in_p - d_in)))

    # ---- VMEM budget: single-buffered weights + double-buffered x/out ------
    itemsize_w = jnp.dtype(w_dtype).itemsize
    est = (
        (w1t.size + w2t.size + w3t.size) * itemsize_w           # resident weights
        + (h0_p + h1_p + d_out_p) * 4                            # resident biases
        + 2 * tile_b * (d_in_p + d_out_p) * 4                    # x/out double buf
        + 3 * tile_b * max(h0_p, h1_p, d_out_p) * 4              # live intermediates
    )
    vmem_limit = int(min(max(2 * est, 32 * 1024 * 1024), 48 * 1024 * 1024))

    flops = 2 * batch_p * (d_in_p * h0_p + h0_p * h1_p + h1_p * d_out_p)
    transcendentals = batch_p * (h0_p + h1_p) if activation == "tanh" else 0
    bytes_accessed = int(
        x_p.size * x_p.dtype.itemsize
        + (w1t.size + w2t.size + w3t.size) * itemsize_w
        + (b1r.size + b2r.size + b3r.size) * 4
        + batch_p * d_out_p * jnp.dtype(x.dtype).itemsize
    )

    kernel = functools.partial(
        _three_layer_nn_kernel,
        residual=residual, activation=activation, mxu_dtype=mxu_dtype,
    )

    # Grid-invariant blocks: no need for double-buffering, save VMEM.
    resident = pl.Buffered(1)
    grid = (pl.cdiv(batch_p, tile_b),)

    out_p = pl.pallas_call(
        kernel,
        out_shape=jax.ShapeDtypeStruct((batch_p, d_out_p), x.dtype),
        grid=grid,
        in_specs=[
            # x: tiled over batch; lane-dense (128-multiple) feature dim.
            pl.BlockSpec((tile_b, d_in_p), lambda i: (i, 0)),
            # Pre-transposed weights / biases: full resident VMEM blocks.
            pl.BlockSpec((d_in_p, h0_p), lambda i: (0, 0), pipeline_mode=resident),
            pl.BlockSpec((1, h0_p), lambda i: (0, 0), pipeline_mode=resident),
            pl.BlockSpec((h0_p, h1_p), lambda i: (0, 0), pipeline_mode=resident),
            pl.BlockSpec((1, h1_p), lambda i: (0, 0), pipeline_mode=resident),
            pl.BlockSpec((h1_p, d_out_p), lambda i: (0, 0), pipeline_mode=resident),
            pl.BlockSpec((1, d_out_p), lambda i: (0, 0), pipeline_mode=resident),
        ],
        out_specs=pl.BlockSpec((tile_b, d_out_p), lambda i: (i, 0)),
        compiler_params=pltpu.CompilerParams(
            dimension_semantics=(
                (pltpu.CORE_PARALLEL,) if core_parallel else ("parallel",)
            ),
            vmem_limit_bytes=vmem_limit,
        ),
        cost_estimate=pl.CostEstimate(
            flops=flops,
            transcendentals=transcendentals,
            bytes_accessed=bytes_accessed,
        ),
    )(x_p, w1t, b1r, w2t, b2r, w3t, b3r)

    # Slice back to the logical (batch, d_out) shape (drops zero padding).
    return out_p[:batch, :d_out]


def _reference(x, params, *, residual=True, activation="relu"):
    act = (lambda v: jnp.maximum(v, 0.0)) if activation == "relu" else jnp.tanh
    h = act(x @ params["w1"].T + params["b1"])
    h = act(h @ params["w2"].T + params["b2"])
    res = h @ params["w3"].T + params["b3"]
    return res + x if residual else res


if __name__ == "__main__":
    key = jax.random.PRNGKey(0)
    k_x, k_w1, k_b1, k_w2, k_b2, k_w3, k_b3 = jax.random.split(key, 7)

    batch = 16
    input_dim = 32
    hidden_dim = (64, 64)
    output_dim = 32          # == input_dim so the residual path is exercised

    scale = 0.1
    params = {
        "w1": scale * jax.random.normal(k_w1, (hidden_dim[0], input_dim), jnp.float32),
        "b1": scale * jax.random.normal(k_b1, (hidden_dim[0],), jnp.float32),
        "w2": scale * jax.random.normal(k_w2, (hidden_dim[1], hidden_dim[0]), jnp.float32),
        "b2": scale * jax.random.normal(k_b2, (hidden_dim[1],), jnp.float32),
        "w3": scale * jax.random.normal(k_w3, (output_dim, hidden_dim[1]), jnp.float32),
        "b3": scale * jax.random.normal(k_b3, (output_dim,), jnp.float32),
    }
    x = jax.random.normal(k_x, (batch, input_dim), jnp.float32)

    # 1) f32 MXU path: exact parity with the reference.
    out = jax.block_until_ready(
        three_layer_nn_forward(x, params, residual=True, activation="relu"))
    ref = _reference(x, params, residual=True, activation="relu")
    assert out.shape == (batch, output_dim)
    assert jnp.allclose(out, ref, atol=1e-5, rtol=1e-5), "f32 mismatch vs reference"

    # 2) bf16 MXU path (f32 accumulate) — perf default for v6e/v7x; looser tol.
    out_bf16 = jax.block_until_ready(
        three_layer_nn_forward(x, params, residual=True, activation="relu",
                               mxu_dtype=jnp.bfloat16))
    assert jnp.allclose(out_bf16, ref, atol=2e-2, rtol=2e-2), "bf16 mismatch vs reference"

    # 3) odd batch + non-128 dims + tanh + no residual: exercises padding / tail.
    k2 = jax.random.split(key, 4)
    params2 = {
        "w1": scale * jax.random.normal(k2[0], (40, 24), jnp.float32),
        "b1": scale * jax.random.normal(k2[1], (40,), jnp.float32),
        "w2": scale * jax.random.normal(k2[2], (56, 40), jnp.float32),
        "b2": scale * jax.random.normal(k2[3], (56,), jnp.float32),
        "w3": scale * jax.random.normal(k2[0], (48, 56), jnp.float32),
        "b3": scale * jax.random.normal(k2[1], (48,), jnp.float32),
    }
    x2 = jax.random.normal(k2[2], (13, 24), jnp.float32)
    out2 = jax.block_until_ready(
        three_layer_nn_forward(x2, params2, residual=False, activation="tanh"))
    ref2 = _reference(x2, params2, residual=False, activation="tanh")
    assert out2.shape == (13, 48)
    assert jnp.allclose(out2, ref2, atol=1e-3, rtol=1e-3), "tanh mismatch vs reference"

    print("KERNEL_OK")
</pallas_src>

<mosaic_0001>
module attributes {stable_mosaic.version = 11 : i64} {
  func.func @_three_layer_nn_kernel(%arg0: i32, %arg1: memref<16x128xf32, #tpu.memory_space<vmem>>, %arg2: memref<128x128xf32, #tpu.memory_space<vmem>>, %arg3: memref<1x128xf32, #tpu.memory_space<vmem>>, %arg4: memref<128x128xf32, #tpu.memory_space<vmem>>, %arg5: memref<1x128xf32, #tpu.memory_space<vmem>>, %arg6: memref<128x128xf32, #tpu.memory_space<vmem>>, %arg7: memref<1x128xf32, #tpu.memory_space<vmem>>, %arg8: memref<16x128xf32, #tpu.memory_space<vmem>>) attributes {dimension_semantics = [#tpu.dimension_semantics<parallel>], iteration_bounds = array<i64: 1>, scalar_prefetch = 0 : i64, scratch_operands = 0 : i64, tpu.core_type = #tpu.core_type<tc>, window_params = [{transform_indices = @transform_0, window_bounds = array<i64: 16, 128>}, {pipeline_mode = #tpu.pipeline_mode<synchronous>, transform_indices = @transform_1, window_bounds = array<i64: 128, 128>}, {pipeline_mode = #tpu.pipeline_mode<synchronous>, transform_indices = @transform_2, window_bounds = array<i64: 1, 128>}, {pipeline_mode = #tpu.pipeline_mode<synchronous>, transform_indices = @transform_3, window_bounds = array<i64: 128, 128>}, {pipeline_mode = #tpu.pipeline_mode<synchronous>, transform_indices = @transform_4, window_bounds = array<i64: 1, 128>}, {pipeline_mode = #tpu.pipeline_mode<synchronous>, transform_indices = @transform_5, window_bounds = array<i64: 128, 128>}, {pipeline_mode = #tpu.pipeline_mode<synchronous>, transform_indices = @transform_6, window_bounds = array<i64: 1, 128>}, {transform_indices = @transform_7, window_bounds = array<i64: 16, 128>}]} {
    %c0 = arith.constant 0 : index
    %c0_0 = arith.constant 0 : index
    %0 = vector.load %arg1[%c0, %c0_0] : memref<16x128xf32, #tpu.memory_space<vmem>>, vector<16x128xf32>
    %c0_1 = arith.constant 0 : index
    %c0_2 = arith.constant 0 : index
    %1 = vector.load %arg2[%c0_1, %c0_2] : memref<128x128xf32, #tpu.memory_space<vmem>>, vector<128x128xf32>
    %cst = arith.constant dense<0.000000e+00> : vector<16x128xf32>
    %2 = tpu.matmul %0, %1, %cst {dimension_numbers = #tpu.dot_dimension_numbers<[1], [0], [0], [1], [0, 0, 1, 1], [], []>} : vector<16x128xf32>, vector<128x128xf32>, vector<16x128xf32> -> vector<16x128xf32>
    %c0_3 = arith.constant 0 : index
    %c0_4 = arith.constant 0 : index
    %3 = vector.load %arg3[%c0_3, %c0_4] : memref<1x128xf32, #tpu.memory_space<vmem>>, vector<1x128xf32>
    %4 = vector.broadcast %3 : vector<1x128xf32> to vector<16x128xf32>
    %5 = arith.addf %2, %4 : vector<16x128xf32>
    %cst_5 = arith.constant 0.000000e+00 : f32
    %6 = vector.broadcast %cst_5 : f32 to vector<16x128xf32>
    %7 = arith.maximumf %5, %6 : vector<16x128xf32>
    %c0_6 = arith.constant 0 : index
    %c0_7 = arith.constant 0 : index
    %8 = vector.load %arg4[%c0_6, %c0_7] : memref<128x128xf32, #tpu.memory_space<vmem>>, vector<128x128xf32>
    %cst_8 = arith.constant dense<0.000000e+00> : vector<16x128xf32>
    %9 = tpu.matmul %7, %8, %cst_8 {dimension_numbers = #tpu.dot_dimension_numbers<[1], [0], [0], [1], [0, 0, 1, 1], [], []>} : vector<16x128xf32>, vector<128x128xf32>, vector<16x128xf32> -> vector<16x128xf32>
    %c0_9 = arith.constant 0 : index
    %c0_10 = arith.constant 0 : index
    %10 = vector.load %arg5[%c0_9, %c0_10] : memref<1x128xf32, #tpu.memory_space<vmem>>, vector<1x128xf32>
    %11 = vector.broadcast %10 : vector<1x128xf32> to vector<16x128xf32>
    %12 = arith.addf %9, %11 : vector<16x128xf32>
    %cst_11 = arith.constant 0.000000e+00 : f32
    %13 = vector.broadcast %cst_11 : f32 to vector<16x128xf32>
    %14 = arith.maximumf %12, %13 : vector<16x128xf32>
    %c0_12 = arith.constant 0 : index
    %c0_13 = arith.constant 0 : index
    %15 = vector.load %arg6[%c0_12, %c0_13] : memref<128x128xf32, #tpu.memory_space<vmem>>, vector<128x128xf32>
    %cst_14 = arith.constant dense<0.000000e+00> : vector<16x128xf32>
    %16 = tpu.matmul %14, %15, %cst_14 {dimension_numbers = #tpu.dot_dimension_numbers<[1], [0], [0], [1], [0, 0, 1, 1], [], []>} : vector<16x128xf32>, vector<128x128xf32>, vector<16x128xf32> -> vector<16x128xf32>
    %c0_15 = arith.constant 0 : index
    %c0_16 = arith.constant 0 : index
    %17 = vector.load %arg7[%c0_15, %c0_16] : memref<1x128xf32, #tpu.memory_space<vmem>>, vector<1x128xf32>
    %18 = vector.broadcast %17 : vector<1x128xf32> to vector<16x128xf32>
    %19 = arith.addf %16, %18 : vector<16x128xf32>
    %20 = arith.addf %19, %0 : vector<16x128xf32>
    %c0_17 = arith.constant 0 : index
    %c0_18 = arith.constant 0 : index
    %21 = vector.load %arg8[%c0_17, %c0_18] : memref<16x128xf32, #tpu.memory_space<vmem>>, vector<16x128xf32>
    tpu.vector_store %arg8[%c0_17, %c0_18], %20 {strides = array<i32>} : memref<16x128xf32, #tpu.memory_space<vmem>>, vector<16x128xf32>,
    return
  }
  func.func @transform_0(%arg0: i32) -> (i32, i32) {
    %c0_i32 = arith.constant 0 : i32
    %c0_i32_0 = arith.constant 0 : i32
    return %arg0, %c0_i32 : i32, i32
  }
  func.func @transform_1(%arg0: i32) -> (i32, i32) {
    %c0_i32 = arith.constant 0 : i32
    %c0_i32_0 = arith.constant 0 : i32
    %c0_i32_1 = arith.constant 0 : i32
    return %c0_i32, %c0_i32_0 : i32, i32
  }
  func.func @transform_2(%arg0: i32) -> (i32, i32) {
    %c0_i32 = arith.constant 0 : i32
    %c0_i32_0 = arith.constant 0 : i32
    %c0_i32_1 = arith.constant 0 : i32
    return %c0_i32, %c0_i32_0 : i32, i32
  }
  func.func @transform_3(%arg0: i32) -> (i32, i32) {
    %c0_i32 = arith.constant 0 : i32
    %c0_i32_0 = arith.constant 0 : i32
    %c0_i32_1 = arith.constant 0 : i32
    return %c0_i32, %c0_i32_0 : i32, i32
  }
  func.func @transform_4(%arg0: i32) -> (i32, i32) {
    %c0_i32 = arith.constant 0 : i32
    %c0_i32_0 = arith.constant 0 : i32
    %c0_i32_1 = arith.constant 0 : i32
    return %c0_i32, %c0_i32_0 : i32, i32
  }
  func.func @transform_5(%arg0: i32) -> (i32, i32) {
    %c0_i32 = arith.constant 0 : i32
    %c0_i32_0 = arith.constant 0 : i32
    %c0_i32_1 = arith.constant 0 : i32
    return %c0_i32, %c0_i32_0 : i32, i32
  }
  func.func @transform_6(%arg0: i32) -> (i32, i32) {
    %c0_i32 = arith.constant 0 : i32
    %c0_i32_0 = arith.constant 0 : i32
    %c0_i32_1 = arith.constant 0 : i32
    return %c0_i32, %c0_i32_0 : i32, i32
  }
  func.func @transform_7(%arg0: i32) -> (i32, i32) {
    %c0_i32 = arith.constant 0 : i32
    %c0_i32_0 = arith.constant 0 : i32
    return %arg0, %c0_i32 : i32, i32
  }
}

</mosaic_0001>

<llo_original>
// kernel: tpu_custom_call.1
$region0: #{tpu_custom_call.1}
  #allocation0 [shape = 'u32[]', space=smem, size = 0x4, offset = 0x4, fixed_abs, tag = 'smem constant byte address 0x4 - core index']
  #allocation1 [shape = 'u32[144,128]{1,0:T(1,128)}', space=vmem, size = 0x12000, scoped, tag = 'internal scratch']
  %s0 = inlined_call_operand.hbm [shape: f32[16,128], index: 0, kind: input, shape index: {}]
  %s1 = inlined_call_operand.hbm [shape: f32[128,128], index: 1, kind: input, shape index: {}]
  %s2 = inlined_call_operand.vmem [shape: f32[1,128], index: 2, kind: input, shape index: {}]
  %s3 = inlined_call_operand.hbm [shape: f32[128,128], index: 3, kind: input, shape index: {}]
  %s4 = inlined_call_operand.vmem [shape: f32[1,128], index: 4, kind: input, shape index: {}]
  %s5 = inlined_call_operand.hbm [shape: f32[128,128], index: 5, kind: input, shape index: {}]
  %s6 = inlined_call_operand.vmem [shape: f32[1,128], index: 6, kind: input, shape index: {}]
  %s7 = inlined_call_operand.hbm [shape: f32[16,128], index: 7, kind: output, shape index: {}]
  %s8 = sld [smem:[#allocation0]]
  $region54: #{tpu_custom_call.1} parent=0
    _
  %s10 = ssub.s32 1, %s8
  %s11 = scalar_select 0, %s10, %s8
  $region1: #{tpu_custom_call.1} parent=0
    #allocation2 [shape = 'u8[8192]{0}', space=vmem, size = 0x2000, scoped, tag = 'input window, operand 0, single buffered']
    #allocation3 [shape = 's32[1]{0}', space=sflag, size = 0x4, scoped, tag = 'scoped memory for tpu_custom_call.1']
    #allocation4 [shape = 's32[1]{0}', space=sflag, size = 0x4, scoped, tag = 'scoped memory for tpu_custom_call.1']
    #allocation5 [shape = 'u8[65536]{0}', space=vmem, size = 0x10000, scoped, tag = 'input window, operand 1, single buffered']
    #allocation6 [shape = 's32[1]{0}', space=sflag, size = 0x4, scoped, tag = 'scoped memory for tpu_custom_call.1']
    #allocation7 [shape = 'u8[65536]{0}', space=vmem, size = 0x10000, scoped, tag = 'input window, operand 3, single buffered']
    #allocation8 [shape = 'u8[65536]{0}', space=vmem, size = 0x10000, scoped, tag = 'input window, operand 5, single buffered']
    #allocation9 [shape = 's32[1]{0}', space=sflag, size = 0x4, scoped, tag = 'scoped memory for tpu_custom_call.1']
    #allocation10 [shape = 'u8[8192]{0}', space=vmem, size = 0x2000, scoped, tag = 'output window, operand 0, single buffered']
    %12 = vsyncpa [#allocation3], 0
    %13 = vsyncpa [#allocation6], 0
    %14 = vsyncpa [#allocation9], 0
    %15 = vsyncpa [#allocation4], 0
    // Predicated region
    $region2: #{tpu_custom_call.1} parent=1 // pred_check
      _
    $region3: #{tpu_custom_call.1} parent=1 // pred_check_branch
      %17 = sbr.rel (0) target = $region5
    $region4: #{tpu_custom_call.1} parent=1 // pred_region
      %s19 = ssub.s32 256, 256
      %20 = vsyncadd [#allocation3], %s19
      %s21 = sshll.u32 [#allocation2], 4
      %s22 = int_to_ptr.vmem [resolvable:$true] %s21
      %27 = dma.hbm_to_vmem [thread:$0]  %s0, 256, %s22, [#allocation3], 128, 128, 8
    $region5: #{tpu_custom_call.1} parent=1 // pred_fallthru
      _
    // Predicated region
    $region6: #{tpu_custom_call.1} parent=1 // pred_check
      _
    $region7: #{tpu_custom_call.1} parent=1 // pred_check_branch
      %29 = sbr.rel (0) target = $region9
    $region8: #{tpu_custom_call.1} parent=1 // pred_region
      %s31 = ssub.s32 2048, 2048
      %32 = vsyncadd [#allocation6], %s31
      %s33 = sshll.u32 [#allocation5], 4
      %s34 = int_to_ptr.vmem [resolvable:$true] %s33
      %39 = dma.hbm_to_vmem [thread:$0]  %s1, 2048, %s34, [#allocation6], 128, 128, 8
    $region9: #{tpu_custom_call.1} parent=1 // pred_fallthru
      _
    // Predicated region
    $region10: #{tpu_custom_call.1} parent=1 // pred_check
      _
    $region11: #{tpu_custom_call.1} parent=1 // pred_check_branch
      %41 = sbr.rel (0) target = $region13
    $region12: #{tpu_custom_call.1} parent=1 // pred_region
      _
    $region13: #{tpu_custom_call.1} parent=1 // pred_fallthru
      _
    // Predicated region
    $region14: #{tpu_custom_call.1} parent=1 // pred_check
      _
    $region15: #{tpu_custom_call.1} parent=1 // pred_check_branch
      %43 = sbr.rel (0) target = $region17
    $region16: #{tpu_custom_call.1} parent=1 // pred_region
      %s45 = ssub.s32 2048, 2048
      %46 = vsyncadd [#allocation6], %s45
      %s47 = sshll.u32 [#allocation7], 4
      %s48 = int_to_ptr.vmem [resolvable:$true] %s47
      %53 = dma.hbm_to_vmem [thread:$0]  %s3, 2048, %s48, [#allocation6], 128, 128, 8
    $region17: #{tpu_custom_call.1} parent=1 // pred_fallthru
      _
    // Predicated region
    $region18: #{tpu_custom_call.1} parent=1 // pred_check
      _
    $region19: #{tpu_custom_call.1} parent=1 // pred_check_branch
      %55 = sbr.rel (0) target = $region21
    $region20: #{tpu_custom_call.1} parent=1 // pred_region
      _
    $region21: #{tpu_custom_call.1} parent=1 // pred_fallthru
      _
    // Predicated region
    $region22: #{tpu_custom_call.1} parent=1 // pred_check
      _
    $region23: #{tpu_custom_call.1} parent=1 // pred_check_branch
      %57 = sbr.rel (0) target = $region25
    $region24: #{tpu_custom_call.1} parent=1 // pred_region
      %s59 = ssub.s32 2048, 2048
      %60 = vsyncadd [#allocation9], %s59
      %s61 = sshll.u32 [#allocation8], 4
      %s62 = int_to_ptr.vmem [resolvable:$true] %s61
      %67 = dma.hbm_to_vmem [thread:$0]  %s5, 2048, %s62, [#allocation9], 128, 128, 8
    $region25: #{tpu_custom_call.1} parent=1 // pred_fallthru
      _
    // Predicated region
    $region26: #{tpu_custom_call.1} parent=1 // pred_check
      _
    $region27: #{tpu_custom_call.1} parent=1 // pred_check_branch
      %69 = sbr.rel (0) target = $region29
    $region28: #{tpu_custom_call.1} parent=1 // pred_region
      _
    $region29: #{tpu_custom_call.1} parent=1 // pred_fallthru
      _
    // Predicated region
    $region30: #{tpu_custom_call.1} parent=1 // pred_check
      _
    $region31: #{tpu_custom_call.1} parent=1 // pred_check_branch
      %71 = sbr.rel (0) target = $region33
    $region32: #{tpu_custom_call.1} parent=1 // pred_region
      %72 = dma.done [#allocation3], 256
    $region33: #{tpu_custom_call.1} parent=1 // pred_fallthru
      _
    // Predicated region
    $region34: #{tpu_custom_call.1} parent=1 // pred_check
      _
    $region35: #{tpu_custom_call.1} parent=1 // pred_check_branch
      %74 = sbr.rel (0) target = $region37
    $region36: #{tpu_custom_call.1} parent=1 // pred_region
      %75 = dma.done [#allocation6], 2048
    $region37: #{tpu_custom_call.1} parent=1 // pred_fallthru
      _
    // Predicated region
    $region38: #{tpu_custom_call.1} parent=1 // pred_check
      _
    $region39: #{tpu_custom_call.1} parent=1 // pred_check_branch
      %77 = sbr.rel (0) target = $region41
    $region40: #{tpu_custom_call.1} parent=1 // pred_region
      %78 = dma.done [#allocation6], 2048
    $region41: #{tpu_custom_call.1} parent=1 // pred_fallthru
      _
    // Predicated region
    $region42: #{tpu_custom_call.1} parent=1 // pred_check
      _
    $region43: #{tpu_custom_call.1} parent=1 // pred_check_branch
      %80 = sbr.rel (0) target = $region45
    $region44: #{tpu_custom_call.1} parent=1 // pred_region
      %81 = dma.done [#allocation9], 2048
    $region45: #{tpu_custom_call.1} parent=1 // pred_fallthru
      _
    %v82 = vld [vmem:[#allocation2] sm:$0xff]
    %v83 = vld [vmem:[#allocation2 + $0x8] sm:$0xff]
    %v84 = vld [vmem:[#allocation5] sm:$0xff]
    %v85 = vld [vmem:[#allocation5 + $0x8] sm:$0xff]
    %v86 = vld [vmem:[#allocation5 + $0x10] sm:$0xff]
    %v87 = vld [vmem:[#allocation5 + $0x18] sm:$0xff]
    %v88 = vld [vmem:[#allocation5 + $0x20] sm:$0xff]
    %v89 = vld [vmem:[#allocation5 + $0x28] sm:$0xff]
    %v90 = vld [vmem:[#allocation5 + $0x30] sm:$0xff]
    %v91 = vld [vmem:[#allocation5 + $0x38] sm:$0xff]
    %v92 = vld [vmem:[#allocation5 + $0x40] sm:$0xff]
    %v93 = vld [vmem:[#allocation5 + $0x48] sm:$0xff]
    %v94 = vld [vmem:[#allocation5 + $0x50] sm:$0xff]
    %v95 = vld [vmem:[#allocation5 + $0x58] sm:$0xff]
    %v96 = vld [vmem:[#allocation5 + $0x60] sm:$0xff]
    %v97 = vld [vmem:[#allocation5 + $0x68] sm:$0xff]
    %v98 = vld [vmem:[#allocation5 + $0x70] sm:$0xff]
    %v99 = vld [vmem:[#allocation5 + $0x78] sm:$0xff]
    %v100 = vld [vmem:[%s2] sm:$0x1]
    %v102 = vlaneseq
    %v103 = vshrl.u32 %v102, 7
    %v104 = vsub.s32 0, %v103
    %v105 = vrot.slane %v100, %v104
    %107 = vmatprep.subr.mxu0 0.0
    %108 = vmatpush1.msra.mxu0 %v99
    %109 = vmatprep.subr.mxu0 0.0
    %110 = vmatpush1.msra.mxu0 %v98
    %111 = vmatprep.subr.mxu0 0.0
    %112 = vmatpush1.msra.mxu0 %v97
    %113 = vmatprep.subr.mxu0 0.0
    %114 = vmatpush1.msra.mxu0 %v96
    %115 = vmatprep.subr.mxu0 0.0
    %116 = vmatpush1.msra.mxu0 %v95
    %117 = vmatprep.subr.mxu0 0.0
    %118 = vmatpush1.msra.mxu0 %v94
    %119 = vmatprep.subr.mxu0 0.0
    %120 = vmatpush1.msra.mxu0 %v93
    %121 = vmatprep.subr.mxu0 0.0
    %122 = vmatpush1.msra.mxu0 %v92
    %123 = vmatprep.subr.mxu0 0.0
    %124 = vmatpush1.msra.mxu0 %v91
    %125 = vmatprep.subr.mxu0 0.0
    %126 = vmatpush1.msra.mxu0 %v90
    %127 = vmatprep.subr.mxu0 0.0
    %128 = vmatpush1.msra.mxu0 %v89
    %129 = vmatprep.subr.mxu0 0.0
    %130 = vmatpush1.msra.mxu0 %v88
    %131 = vmatprep.subr.mxu0 0.0
    %132 = vmatpush1.msra.mxu0 %v87
    %133 = vmatprep.subr.mxu0 0.0
    %134 = vmatpush1.msra.mxu0 %v86
    %135 = vmatprep.subr.mxu0 0.0
    %136 = vmatpush1.msra.mxu0 %v85
    %137 = vmatprep.subr.mxu0 0.0
    %138 = vmatpush1.msra.mxu0 %v84
    %139 = vmatprep.subr.mxu0 0.0
    %140 = vmatpush2.msra.mxu0 0.0
    %141 = vmatprep.subr.mxu0 0.0
    %142 = vmatpush2.msra.mxu0 0.0
    %143 = vmatprep.subr.mxu0 0.0
    %144 = vmatpush2.msra.mxu0 0.0
    %145 = vmatprep.subr.mxu0 0.0
    %146 = vmatpush2.msra.mxu0 0.0
    %147 = vmatprep.subr.mxu0 0.0
    %148 = vmatpush2.msra.mxu0 0.0
    %149 = vmatprep.subr.mxu0 0.0
    %150 = vmatpush2.msra.mxu0 0.0
    %151 = vmatprep.subr.mxu0 0.0
    %152 = vmatpush2.msra.mxu0 0.0
    %153 = vmatprep.subr.mxu0 0.0
    %154 = vmatpush2.msra.mxu0 0.0
    %155 = vmatprep.subr.mxu0 0.0
    %156 = vmatpush2.msra.mxu0 0.0
    %157 = vmatprep.subr.mxu0 0.0
    %158 = vmatpush2.msra.mxu0 0.0
    %159 = vmatprep.subr.mxu0 0.0
    %160 = vmatpush2.msra.mxu0 0.0
    %161 = vmatprep.subr.mxu0 0.0
    %162 = vmatpush2.msra.mxu0 0.0
    %163 = vmatprep.subr.mxu0 0.0
    %164 = vmatpush2.msra.mxu0 0.0
    %165 = vmatprep.subr.mxu0 0.0
    %166 = vmatpush2.msra.mxu0 0.0
    %167 = vmatprep.subr.mxu0 0.0
    %168 = vmatpush2.msra.mxu0 0.0
    %169 = vmatprep.subr.mxu0 0.0
    %170 = vmatpush2.msra.mxu0 0.0
    %171 = vmatprep.mubr.f32.mxu0 0.0
    %172 = vmatmul.mubr.f32.gmra.mxu0 %v82
    %v173 = vpop.f32.mrf.mxu0
    %v174 = vadd.f32 %v105, %v173
    %v175 = vpop.f32.mrf.mxu0
    %176 = vmatprep.mubr.f32.mxu0 0.0
    %177 = vmatmul.mubr.f32.gmra.mxu0 %v83
    %v178 = vpop.f32.mrf.mxu0
    %v179 = vadd.f32 %v105, %v178
    %v180 = vpop.f32.mrf.mxu0
    %181 = vdwg.mxu0
    %v182 = vmax.f32 %v174, 0.0
    %v183 = vmax.f32 %v179, 0.0
    %v184 = vld [vmem:[#allocation7] sm:$0xff]
    %v185 = vld [vmem:[#allocation7 + $0x8] sm:$0xff]
    %v186 = vld [vmem:[#allocation7 + $0x10] sm:$0xff]
    %v187 = vld [vmem:[#allocation7 + $0x18] sm:$0xff]
    %v188 = vld [vmem:[#allocation7 + $0x20] sm:$0xff]
    %v189 = vld [vmem:[#allocation7 + $0x28] sm:$0xff]
    %v190 = vld [vmem:[#allocation7 + $0x30] sm:$0xff]
    %v191 = vld [vmem:[#allocation7 + $0x38] sm:$0xff]
    %v192 = vld [vmem:[#allocation7 + $0x40] sm:$0xff]
    %v193 = vld [vmem:[#allocation7 + $0x48] sm:$0xff]
    %v194 = vld [vmem:[#allocation7 + $0x50] sm:$0xff]
    %v195 = vld [vmem:[#allocation7 + $0x58] sm:$0xff]
    %v196 = vld [vmem:[#allocation7 + $0x60] sm:$0xff]
    %v197 = vld [vmem:[#allocation7 + $0x68] sm:$0xff]
    %v198 = vld [vmem:[#allocation7 + $0x70] sm:$0xff]
    %v199 = vld [vmem:[#allocation7 + $0x78] sm:$0xff]
    %v200 = vld [vmem:[%s4] sm:$0x1]
    %v202 = vlaneseq
    %v203 = vshrl.u32 %v202, 7
    %v204 = vsub.s32 0, %v203
    %v205 = vrot.slane %v200, %v204
    %207 = vmatprep.subr.mxu0 0.0
    %208 = vmatpush1.msra.mxu0 %v199
    %209 = vmatprep.subr.mxu0 0.0
    %210 = vmatpush1.msra.mxu0 %v198
    %211 = vmatprep.subr.mxu0 0.0
    %212 = vmatpush1.msra.mxu0 %v197
    %213 = vmatprep.subr.mxu0 0.0
    %214 = vmatpush1.msra.mxu0 %v196
    %215 = vmatprep.subr.mxu0 0.0
    %216 = vmatpush1.msra.mxu0 %v195
    %217 = vmatprep.subr.mxu0 0.0
    %218 = vmatpush1.msra.mxu0 %v194
    %219 = vmatprep.subr.mxu0 0.0
    %220 = vmatpush1.msra.mxu0 %v193
    %221 = vmatprep.subr.mxu0 0.0
    %222 = vmatpush1.msra.mxu0 %v192
    %223 = vmatprep.subr.mxu0 0.0
    %224 = vmatpush1.msra.mxu0 %v191
    %225 = vmatprep.subr.mxu0 0.0
    %226 = vmatpush1.msra.mxu0 %v190
    %227 = vmatprep.subr.mxu0 0.0
    %228 = vmatpush1.msra.mxu0 %v189
    %229 = vmatprep.subr.mxu0 0.0
    %230 = vmatpush1.msra.mxu0 %v188
    %231 = vmatprep.subr.mxu0 0.0
    %232 = vmatpush1.msra.mxu0 %v187
    %233 = vmatprep.subr.mxu0 0.0
    %234 = vmatpush1.msra.mxu0 %v186
    %235 = vmatprep.subr.mxu0 0.0
    %236 = vmatpush1.msra.mxu0 %v185
    %237 = vmatprep.subr.mxu0 0.0
    %238 = vmatpush1.msra.mxu0 %v184
    %239 = vmatprep.subr.mxu0 0.0
    %240 = vmatpush2.msra.mxu0 0.0
    %241 = vmatprep.subr.mxu0 0.0
    %242 = vmatpush2.msra.mxu0 0.0
    %243 = vmatprep.subr.mxu0 0.0
    %244 = vmatpush2.msra.mxu0 0.0
    %245 = vmatprep.subr.mxu0 0.0
    %246 = vmatpush2.msra.mxu0 0.0
    %247 = vmatprep.subr.mxu0 0.0
    %248 = vmatpush2.msra.mxu0 0.0
    %249 = vmatprep.subr.mxu0 0.0
    %250 = vmatpush2.msra.mxu0 0.0
    %251 = vmatprep.subr.mxu0 0.0
    %252 = vmatpush2.msra.mxu0 0.0
    %253 = vmatprep.subr.mxu0 0.0
    %254 = vmatpush2.msra.mxu0 0.0
    %255 = vmatprep.subr.mxu0 0.0
    %256 = vmatpush2.msra.mxu0 0.0
    %257 = vmatprep.subr.mxu0 0.0
    %258 = vmatpush2.msra.mxu0 0.0
    %259 = vmatprep.subr.mxu0 0.0
    %260 = vmatpush2.msra.mxu0 0.0
    %261 = vmatprep.subr.mxu0 0.0
    %262 = vmatpush2.msra.mxu0 0.0
    %263 = vmatprep.subr.mxu0 0.0
    %264 = vmatpush2.msra.mxu0 0.0
    %265 = vmatprep.subr.mxu0 0.0
    %266 = vmatpush2.msra.mxu0 0.0
    %267 = vmatprep.subr.mxu0 0.0
    %268 = vmatpush2.msra.mxu0 0.0
    %269 = vmatprep.subr.mxu0 0.0
    %270 = vmatpush2.msra.mxu0 0.0
    %271 = vmatprep.mubr.f32.mxu0 0.0
    %272 = vmatmul.mubr.f32.gmra.mxu0 %v182
    %v273 = vpop.f32.mrf.mxu0
    %v274 = vadd.f32 %v205, %v273
    %v275 = vpop.f32.mrf.mxu0
    %276 = vmatprep.mubr.f32.mxu0 0.0
    %277 = vmatmul.mubr.f32.gmra.mxu0 %v183
    %v278 = vpop.f32.mrf.mxu0
    %v279 = vadd.f32 %v205, %v278
    %v280 = vpop.f32.mrf.mxu0
    %281 = vdwg.mxu0
    %v282 = vmax.f32 %v274, 0.0
    %v283 = vmax.f32 %v279, 0.0
    %v284 = vld [vmem:[#allocation8] sm:$0xff]
    %v285 = vld [vmem:[#allocation8 + $0x8] sm:$0xff]
    %v286 = vld [vmem:[#allocation8 + $0x10] sm:$0xff]
    %v287 = vld [vmem:[#allocation8 + $0x18] sm:$0xff]
    %v288 = vld [vmem:[#allocation8 + $0x20] sm:$0xff]
    %v289 = vld [vmem:[#allocation8 + $0x28] sm:$0xff]
    %v290 = vld [vmem:[#allocation8 + $0x30] sm:$0xff]
    %v291 = vld [vmem:[#allocation8 + $0x38] sm:$0xff]
    %v292 = vld [vmem:[#allocation8 + $0x40] sm:$0xff]
    %v293 = vld [vmem:[#allocation8 + $0x48] sm:$0xff]
    %v294 = vld [vmem:[#allocation8 + $0x50] sm:$0xff]
    %v295 = vld [vmem:[#allocation8 + $0x58] sm:$0xff]
    %v296 = vld [vmem:[#allocation8 + $0x60] sm:$0xff]
    %v297 = vld [vmem:[#allocation8 + $0x68] sm:$0xff]
    %v298 = vld [vmem:[#allocation8 + $0x70] sm:$0xff]
    %v299 = vld [vmem:[#allocation8 + $0x78] sm:$0xff]
    %v300 = vld [vmem:[%s6] sm:$0x1]
    %v302 = vlaneseq
    %v303 = vshrl.u32 %v302, 7
    %v304 = vsub.s32 0, %v303
    %v305 = vrot.slane %v300, %v304
    %307 = vmatprep.subr.mxu0 0.0
    %308 = vmatpush1.msra.mxu0 %v299
    %309 = vmatprep.subr.mxu0 0.0
    %310 = vmatpush1.msra.mxu0 %v298
    %311 = vmatprep.subr.mxu0 0.0
    %312 = vmatpush1.msra.mxu0 %v297
    %313 = vmatprep.subr.mxu0 0.0
    %314 = vmatpush1.msra.mxu0 %v296
    %315 = vmatprep.subr.mxu0 0.0
    %316 = vmatpush1.msra.mxu0 %v295
    %317 = vmatprep.subr.mxu0 0.0
    %318 = vmatpush1.msra.mxu0 %v294
    %319 = vmatprep.subr.mxu0 0.0
    %320 = vmatpush1.msra.mxu0 %v293
    %321 = vmatprep.subr.mxu0 0.0
    %322 = vmatpush1.msra.mxu0 %v292
    %323 = vmatprep.subr.mxu0 0.0
    %324 = vmatpush1.msra.mxu0 %v291
    %325 = vmatprep.subr.mxu0 0.0
    %326 = vmatpush1.msra.mxu0 %v290
    %327 = vmatprep.subr.mxu0 0.0
    %328 = vmatpush1.msra.mxu0 %v289
    %329 = vmatprep.subr.mxu0 0.0
    %330 = vmatpush1.msra.mxu0 %v288
    %331 = vmatprep.subr.mxu0 0.0
    %332 = vmatpush1.msra.mxu0 %v287
    %333 = vmatprep.subr.mxu0 0.0
    %334 = vmatpush1.msra.mxu0 %v286
    %335 = vmatprep.subr.mxu0 0.0
    %336 = vmatpush1.msra.mxu0 %v285
    %337 = vmatprep.subr.mxu0 0.0
    %338 = vmatpush1.msra.mxu0 %v284
    %339 = vmatprep.subr.mxu0 0.0
    %340 = vmatpush2.msra.mxu0 0.0
    %341 = vmatprep.subr.mxu0 0.0
    %342 = vmatpush2.msra.mxu0 0.0
    %343 = vmatprep.subr.mxu0 0.0
    %344 = vmatpush2.msra.mxu0 0.0
    %345 = vmatprep.subr.mxu0 0.0
    %346 = vmatpush2.msra.mxu0 0.0
    %347 = vmatprep.subr.mxu0 0.0
    %348 = vmatpush2.msra.mxu0 0.0
    %349 = vmatprep.subr.mxu0 0.0
    %350 = vmatpush2.msra.mxu0 0.0
    %351 = vmatprep.subr.mxu0 0.0
    %352 = vmatpush2.msra.mxu0 0.0
    %353 = vmatprep.subr.mxu0 0.0
    %354 = vmatpush2.msra.mxu0 0.0
    %355 = vmatprep.subr.mxu0 0.0
    %356 = vmatpush2.msra.mxu0 0.0
    %357 = vmatprep.subr.mxu0 0.0
    %358 = vmatpush2.msra.mxu0 0.0
    %359 = vmatprep.subr.mxu0 0.0
    %360 = vmatpush2.msra.mxu0 0.0
    %361 = vmatprep.subr.mxu0 0.0
    %362 = vmatpush2.msra.mxu0 0.0
    %363 = vmatprep.subr.mxu0 0.0
    %364 = vmatpush2.msra.mxu0 0.0
    %365 = vmatprep.subr.mxu0 0.0
    %366 = vmatpush2.msra.mxu0 0.0
    %367 = vmatprep.subr.mxu0 0.0
    %368 = vmatpush2.msra.mxu0 0.0
    %369 = vmatprep.subr.mxu0 0.0
    %370 = vmatpush2.msra.mxu0 0.0
    %371 = vmatprep.mubr.f32.mxu0 0.0
    %372 = vmatmul.mubr.f32.gmra.mxu0 %v282
    %v373 = vpop.f32.mrf.mxu0
    %v374 = vadd.f32 %v305, %v373
    %v375 = vpop.f32.mrf.mxu0
    %376 = vmatprep.mubr.f32.mxu0 0.0
    %377 = vmatmul.mubr.f32.gmra.mxu0 %v283
    %v378 = vpop.f32.mrf.mxu0
    %v379 = vadd.f32 %v305, %v378
    %v380 = vpop.f32.mrf.mxu0
    %381 = vdwg.mxu0
    %v382 = vadd.f32 %v374, %v82
    %v383 = vadd.f32 %v379, %v83
    %384 = vst [vmem:[#allocation10] sm:$0xff] %v382
    %385 = vst [vmem:[#allocation10 + $0x8] sm:$0xff] %v383
    // Predicated region
    $region46: #{tpu_custom_call.1} parent=1 // pred_check
      _
    $region47: #{tpu_custom_call.1} parent=1 // pred_check_branch
      %387 = sbr.rel (0) target = $region49
    $region48: #{tpu_custom_call.1} parent=1 // pred_region
      %s389 = ssub.s32 256, 256
      %390 = vsyncadd [#allocation4], %s389
      %s391 = sshll.u32 [#allocation10], 4
      %s392 = int_to_ptr.vmem [resolvable:$true] %s391
      %397 = dma.vmem_to_hbm [thread:$0]  %s392, 256, %s7, [#allocation4], 128, 128, 8
    $region49: #{tpu_custom_call.1} parent=1 // pred_fallthru
      _
    // Predicated region
    $region50: #{tpu_custom_call.1} parent=1 // pred_check
      _
    $region51: #{tpu_custom_call.1} parent=1 // pred_check_branch
      %399 = sbr.rel (0) target = $region53
    $region52: #{tpu_custom_call.1} parent=1 // pred_region
      %400 = dma.done [#allocation4], 256
    $region53: #{tpu_custom_call.1} parent=1 // pred_fallthru
      _
    %401 = vsyncpa [#allocation3], 1
    %402 = vsyncpa [#allocation6], 1
    %403 = vsyncpa [#allocation9], 1
    %404 = vsyncpa [#allocation4], 1

</llo_original>
